<compile_context>
chip_gen: v5e
topology: v5e:2x2
jax: 0.10.0
libtpu: 0.0.40
codegen_flags: <defaults>
</compile_context>

<pallas_src>
import functools

import jax
import jax.numpy as jnp
from jax.experimental import pallas as pl
from jax.experimental.pallas import tpu as pltpu


def _norm_kernel(pts_ref, out1_ref, out2_ref, *, sx, sy):
    """pts_ref: (B, 4, tn) block, rows [x1, y1, x2, y2], points lane-dense.

    Writes a (B, 3, tn) block into each output:
        row0 = (2/W)*x - 1,  row1 = (2/H)*y - 1,  row2 = 1
    which is exactly T @ [x; y; 1]. VPU-only (no MXU); the kernel is HBM /
    grid-step-overhead bound, so this handful of mul/adds is free filler.
    Only scalar constants are used (no captured array constants).
    """
    x1 = pts_ref[:, 0:1, :]
    y1 = pts_ref[:, 1:2, :]
    x2 = pts_ref[:, 2:3, :]
    y2 = pts_ref[:, 3:4, :]
    ones = jnp.ones_like(x1).astype(out1_ref.dtype)

    out1_ref[:, 0:1, :] = (sx * x1 - 1.0).astype(out1_ref.dtype)
    out1_ref[:, 1:2, :] = (sy * y1 - 1.0).astype(out1_ref.dtype)
    out1_ref[:, 2:3, :] = ones
    out2_ref[:, 0:1, :] = (sx * x2 - 1.0).astype(out2_ref.dtype)
    out2_ref[:, 1:2, :] = (sy * y2 - 1.0).astype(out2_ref.dtype)
    out2_ref[:, 2:3, :] = ones


def _round_up(x, m):
    return ((x + m - 1) // m) * m


def normalize_and_expand_hw(pts, image_size, *, block_n=2048,
                            out_dtype=jnp.float32):
    """JAX/Pallas equivalent of NormalizeAndExpand_HW.forward.

    Args:
      pts: (B, N, 4) correspondences [x1, y1, x2, y2] in pixel coordinates.
      image_size: (H, W).
      block_n: cap on points per grid step (rounded down to a 128 multiple).
      out_dtype: dtype of pts1/pts2 (jnp.bfloat16 halves output write traffic
        if the downstream epipolar consumer tolerates ~4e-3 abs error).

    Returns:
      (pts1, pts2, T1, T2): pts* of shape (B, 3, N), T* of shape (1, 3, 3).
    """
    H, W = image_size
    B, N, C = pts.shape
    assert C == 4, f"expected (B, N, 4) correspondences, got {pts.shape}"
    sx, sy = 2.0 / W, 2.0 / H

    T = jnp.array([[sx, 0.0, -1.0],
                   [0.0, sy, -1.0],
                   [0.0, 0.0, 1.0]], dtype=jnp.float32)[None]     # (1, 3, 3)

    # Lane-dense layout: points on the lane axis, the 4 coords on sublanes.
    # One wrapper-side relayout; every Pallas block is then a dense burst DMA.
    pts_t = jnp.transpose(pts.astype(jnp.float32), (0, 2, 1))     # (B, 4, N)

    # Tile selection: no divisor constraint (cdiv grid handles the ragged
    # last tile). Aim for >= 2 lane tiles when N > 128 so both v7x
    # TensorCores get work; one extra ~0.35us step is harmless on v5e/v6e.
    cap = max(128, (block_n // 128) * 128)
    if N <= 128:
        tn = N                                   # lane dim == full array dim
    elif _round_up(N, 128) <= cap:
        tn = _round_up(_round_up(N, 128) // 2, 128)
    else:
        tn = cap
    grid_n = -(-N // tn)                         # cdiv

    kernel = functools.partial(_norm_kernel, sx=sx, sy=sy)
    out_struct = jax.ShapeDtypeStruct((B, 3, N), out_dtype)
    in_spec = pl.BlockSpec((B, 4, tn), lambda j: (0, 0, j))
    out_spec = pl.BlockSpec((B, 3, tn), lambda j: (0, 0, j))
    out_bytes = 2 * 3 * B * N * jnp.dtype(out_dtype).itemsize
    cost = pl.CostEstimate(flops=8 * B * N, transcendentals=0,
                           bytes_accessed=16 * B * N + out_bytes)

    pts1, pts2 = pl.pallas_call(
        kernel,
        out_shape=(out_struct, out_struct),
        grid=(grid_n,),
        in_specs=[in_spec],
        out_specs=(out_spec, out_spec),
        compiler_params=pltpu.CompilerParams(
            dimension_semantics=("parallel",)),
        cost_estimate=cost,
    )(pts_t)

    return pts1, pts2, T, T


def _reference(pts, image_size):
    # Pure-JAX reference mirroring the PyTorch code (full f32 precision).
    H, W = image_size
    T = jnp.array([[2.0 / W, 0.0, -1.0],
                   [0.0, 2.0 / H, -1.0],
                   [0.0, 0.0, 1.0]], dtype=jnp.float32)[None]
    B, N, _ = pts.shape
    ones = jnp.ones((B, N, 1), jnp.float32)

    def norm(xy):
        h = jnp.concatenate([xy.astype(jnp.float32), ones], axis=2)  # (B,N,3)
        return jnp.einsum("ij,bnj->bin", T[0], h,
                          precision=jax.lax.Precision.HIGHEST)

    return norm(pts[:, :, :2]), norm(pts[:, :, 2:]), T, T


if __name__ == "__main__":
    key = jax.random.PRNGKey(0)
    # (B, N, H, W): tiny case, a non-multiple-of-128 N (ragged last tile),
    # and a multi-tile N (exercises the cdiv grid with cap=2048).
    cases = [(2, 8, 16, 16), (2, 1000, 120, 160), (2, 4608, 480, 640)]
    for B, N, H, W in cases:
        key, sub = jax.random.split(key)
        pts = jax.random.uniform(sub, (B, N, 4), jnp.float32) * jnp.array(
            [W, H, W, H], jnp.float32)

        pts1, pts2, T1, T2 = normalize_and_expand_hw(pts, (H, W))
        jax.block_until_ready((pts1, pts2, T1, T2))

        r1, r2, rT1, rT2 = _reference(pts, (H, W))
        assert pts1.shape == (B, 3, N) and pts2.shape == (B, 3, N)
        assert T1.shape == (1, 3, 3) and T2.shape == (1, 3, 3)
        assert jnp.allclose(pts1, r1, atol=1e-6), f"pts1 mismatch {(B, N, H, W)}"
        assert jnp.allclose(pts2, r2, atol=1e-6), f"pts2 mismatch {(B, N, H, W)}"
        assert jnp.allclose(T1, rT1) and jnp.allclose(T2, rT2)

    print("KERNEL_OK")
</pallas_src>

<mosaic_0001>
module attributes {stable_mosaic.version = 11 : i64} {
  func.func @_norm_kernel(%arg0: i32, %arg1: memref<2x4x8xf32, #tpu.memory_space<vmem>>, %arg2: memref<2x3x8xf32, #tpu.memory_space<vmem>>, %arg3: memref<2x3x8xf32, #tpu.memory_space<vmem>>) attributes {dimension_semantics = [#tpu.dimension_semantics<parallel>], iteration_bounds = array<i64: 1>, scalar_prefetch = 0 : i64, scratch_operands = 0 : i64, tpu.core_type = #tpu.core_type<tc>, window_params = [{transform_indices = @transform_0, window_bounds = array<i64: 2, 4, 8>}, {transform_indices = @transform_1, window_bounds = array<i64: 2, 3, 8>}, {transform_indices = @transform_2, window_bounds = array<i64: 2, 3, 8>}]} {
    %c0 = arith.constant 0 : index
    %c0_0 = arith.constant 0 : index
    %c0_1 = arith.constant 0 : index
    %0 = vector.load %arg1[%c0, %c0_0, %c0_1] : memref<2x4x8xf32, #tpu.memory_space<vmem>>, vector<2x1x8xf32>
    %c0_2 = arith.constant 0 : index
    %c1 = arith.constant 1 : index
    %c0_3 = arith.constant 0 : index
    %1 = vector.load %arg1[%c0_2, %c1, %c0_3] : memref<2x4x8xf32, #tpu.memory_space<vmem>>, vector<2x1x8xf32>
    %c0_4 = arith.constant 0 : index
    %c2 = arith.constant 2 : index
    %c0_5 = arith.constant 0 : index
    %2 = vector.load %arg1[%c0_4, %c2, %c0_5] : memref<2x4x8xf32, #tpu.memory_space<vmem>>, vector<2x1x8xf32>
    %c0_6 = arith.constant 0 : index
    %c3 = arith.constant 3 : index
    %c0_7 = arith.constant 0 : index
    %3 = vector.load %arg1[%c0_6, %c3, %c0_7] : memref<2x4x8xf32, #tpu.memory_space<vmem>>, vector<2x1x8xf32>
    %cst = arith.constant 1.000000e+00 : f32
    %4 = vector.broadcast %cst : f32 to vector<2x1x8xf32>
    %cst_8 = arith.constant 1.250000e-01 : f32
    %5 = vector.broadcast %cst_8 : f32 to vector<2x1x8xf32>
    %6 = arith.mulf %5, %0 : vector<2x1x8xf32>
    %cst_9 = arith.constant 1.000000e+00 : f32
    %7 = vector.broadcast %cst_9 : f32 to vector<2x1x8xf32>
    %8 = arith.subf %6, %7 : vector<2x1x8xf32>
    %c0_10 = arith.constant 0 : index
    %c0_11 = arith.constant 0 : index
    %c0_12 = arith.constant 0 : index
    %9 = vector.load %arg2[%c0_10, %c0_11, %c0_12] : memref<2x3x8xf32, #tpu.memory_space<vmem>>, vector<2x1x8xf32>
    tpu.vector_store %arg2[%c0_10, %c0_11, %c0_12], %8 {strides = array<i32>} : memref<2x3x8xf32, #tpu.memory_space<vmem>>, vector<2x1x8xf32>,
    %cst_13 = arith.constant 1.250000e-01 : f32
    %10 = vector.broadcast %cst_13 : f32 to vector<2x1x8xf32>
    %11 = arith.mulf %10, %1 : vector<2x1x8xf32>
    %cst_14 = arith.constant 1.000000e+00 : f32
    %12 = vector.broadcast %cst_14 : f32 to vector<2x1x8xf32>
    %13 = arith.subf %11, %12 : vector<2x1x8xf32>
    %c0_15 = arith.constant 0 : index
    %c1_16 = arith.constant 1 : index
    %c0_17 = arith.constant 0 : index
    %14 = vector.load %arg2[%c0_15, %c1_16, %c0_17] : memref<2x3x8xf32, #tpu.memory_space<vmem>>, vector<2x1x8xf32>
    tpu.vector_store %arg2[%c0_15, %c1_16, %c0_17], %13 {strides = array<i32>} : memref<2x3x8xf32, #tpu.memory_space<vmem>>, vector<2x1x8xf32>,
    %c0_18 = arith.constant 0 : index
    %c2_19 = arith.constant 2 : index
    %c0_20 = arith.constant 0 : index
    %15 = vector.load %arg2[%c0_18, %c2_19, %c0_20] : memref<2x3x8xf32, #tpu.memory_space<vmem>>, vector<2x1x8xf32>
    tpu.vector_store %arg2[%c0_18, %c2_19, %c0_20], %4 {strides = array<i32>} : memref<2x3x8xf32, #tpu.memory_space<vmem>>, vector<2x1x8xf32>,
    %cst_21 = arith.constant 1.250000e-01 : f32
    %16 = vector.broadcast %cst_21 : f32 to vector<2x1x8xf32>
    %17 = arith.mulf %16, %2 : vector<2x1x8xf32>
    %cst_22 = arith.constant 1.000000e+00 : f32
    %18 = vector.broadcast %cst_22 : f32 to vector<2x1x8xf32>
    %19 = arith.subf %17, %18 : vector<2x1x8xf32>
    %c0_23 = arith.constant 0 : index
    %c0_24 = arith.constant 0 : index
    %c0_25 = arith.constant 0 : index
    %20 = vector.load %arg3[%c0_23, %c0_24, %c0_25] : memref<2x3x8xf32, #tpu.memory_space<vmem>>, vector<2x1x8xf32>
    tpu.vector_store %arg3[%c0_23, %c0_24, %c0_25], %19 {strides = array<i32>} : memref<2x3x8xf32, #tpu.memory_space<vmem>>, vector<2x1x8xf32>,
    %cst_26 = arith.constant 1.250000e-01 : f32
    %21 = vector.broadcast %cst_26 : f32 to vector<2x1x8xf32>
    %22 = arith.mulf %21, %3 : vector<2x1x8xf32>
    %cst_27 = arith.constant 1.000000e+00 : f32
    %23 = vector.broadcast %cst_27 : f32 to vector<2x1x8xf32>
    %24 = arith.subf %22, %23 : vector<2x1x8xf32>
    %c0_28 = arith.constant 0 : index
    %c1_29 = arith.constant 1 : index
    %c0_30 = arith.constant 0 : index
    %25 = vector.load %arg3[%c0_28, %c1_29, %c0_30] : memref<2x3x8xf32, #tpu.memory_space<vmem>>, vector<2x1x8xf32>
    tpu.vector_store %arg3[%c0_28, %c1_29, %c0_30], %24 {strides = array<i32>} : memref<2x3x8xf32, #tpu.memory_space<vmem>>, vector<2x1x8xf32>,
    %c0_31 = arith.constant 0 : index
    %c2_32 = arith.constant 2 : index
    %c0_33 = arith.constant 0 : index
    %26 = vector.load %arg3[%c0_31, %c2_32, %c0_33] : memref<2x3x8xf32, #tpu.memory_space<vmem>>, vector<2x1x8xf32>
    tpu.vector_store %arg3[%c0_31, %c2_32, %c0_33], %4 {strides = array<i32>} : memref<2x3x8xf32, #tpu.memory_space<vmem>>, vector<2x1x8xf32>,
    return
  }
  func.func @transform_0(%arg0: i32) -> (i32, i32, i32) {
    %c0_i32 = arith.constant 0 : i32
    %c0_i32_0 = arith.constant 0 : i32
    %c0_i32_1 = arith.constant 0 : i32
    return %c0_i32, %c0_i32_0, %arg0 : i32, i32, i32
  }
  func.func @transform_1(%arg0: i32) -> (i32, i32, i32) {
    %c0_i32 = arith.constant 0 : i32
    %c0_i32_0 = arith.constant 0 : i32
    %c0_i32_1 = arith.constant 0 : i32
    return %c0_i32, %c0_i32_0, %arg0 : i32, i32, i32
  }
  func.func @transform_2(%arg0: i32) -> (i32, i32, i32) {
    %c0_i32 = arith.constant 0 : i32
    %c0_i32_0 = arith.constant 0 : i32
    %c0_i32_1 = arith.constant 0 : i32
    return %c0_i32, %c0_i32_0, %arg0 : i32, i32, i32
  }
}

</mosaic_0001>

<llo_original>
// kernel: tpu_custom_call.1
$region0: #{tpu_custom_call.1}
  #allocation0 [shape = 'u32[]', space=smem, size = 0x4, offset = 0x4, fixed_abs, tag = 'smem constant byte address 0x4 - core index']
  #allocation1 [shape = 'u32[72,128]{1,0:T(1,128)}', space=vmem, size = 0x9000, scoped, tag = 'internal scratch']
  %s0 = inlined_call_operand.hbm [shape: f32[2,4,8], index: 0, kind: input, shape index: {}]
  %s1 = inlined_call_operand.vmem [shape: f32[2,3,8], index: 1, kind: output, shape index: {0}]
  %s2 = inlined_call_operand.vmem [shape: f32[2,3,8], index: 2, kind: output, shape index: {1}]
  %3 = xla_tuple %s1, %s2
  %s4 = sld [smem:[#allocation0]]
  $region26: #{tpu_custom_call.1} parent=0
    _
  %s6 = ssub.s32 1, %s4
  %s7 = scalar_select 0, %s6, %s4
  $region1: #{tpu_custom_call.1} parent=0
    #allocation2 [shape = 'u8[4096]{0}', space=vmem, size = 0x1000, scoped, tag = 'input window, operand 0, single buffered']
    #allocation3 [shape = 's32[1]{0}', space=sflag, size = 0x4, scoped, tag = 'scoped memory for tpu_custom_call.1']
    %8 = vsyncpa [#allocation3], 0
    // Predicated region
    $region2: #{tpu_custom_call.1} parent=1 // pred_check
      _
    $region3: #{tpu_custom_call.1} parent=1 // pred_check_branch
      %10 = sbr.rel (0) target = $region5
    $region4: #{tpu_custom_call.1} parent=1 // pred_region
      %12 = vsyncadd [#allocation3], 0
      %s13 = sshll.u32 %s0, 4
      %s14 = int_to_ptr.hbm [resolvable:$true] %s13
      %s15 = sshll.u32 [#allocation2], 4
      %s16 = int_to_ptr.vmem [resolvable:$true] %s15
      %21 = dma.hbm_to_vmem [thread:$0]  %s14, 128, %s16, [#allocation3], 64, 64, 4
    $region5: #{tpu_custom_call.1} parent=1 // pred_fallthru
      _
    // Predicated region
    $region6: #{tpu_custom_call.1} parent=1 // pred_check
      _
    $region7: #{tpu_custom_call.1} parent=1 // pred_check_branch
      %23 = sbr.rel (0) target = $region9
    $region8: #{tpu_custom_call.1} parent=1 // pred_region
      %25 = dma.done [#allocation3], 128
    $region9: #{tpu_custom_call.1} parent=1 // pred_fallthru
      _
    %v26 = vld [vmem:[#allocation2] sm:$0x1]
    %v27 = vld [vmem:[#allocation2 + $0x4] sm:$0x1]
    %v28 = vld [vmem:[#allocation2 + $0x1] sm:$0x1]
    %v29 = vld [vmem:[#allocation2 + $0x5] sm:$0x1]
    %v30 = vld [vmem:[#allocation2 + $0x2] sm:$0x1]
    %v31 = vld [vmem:[#allocation2 + $0x6] sm:$0x1]
    %v32 = vld [vmem:[#allocation2 + $0x3] sm:$0x1]
    %v33 = vld [vmem:[#allocation2 + $0x7] sm:$0x1]
    %v34 = vmul.f32 %v26, 0.125
    %v35 = vmul.f32 %v27, 0.125
    %v36 = vsub.f32 %v34, 1.0
    %v37 = vsub.f32 %v35, 1.0
    %vm38 = vcmask 57344
    %39 = vst.msk [vmem:[%s1] sm:$0x1] %vm38, %v36
    %40 = vst.msk [vmem:[%s1 + $0x4] sm:$0x1] %vm38, %v37
    %v41 = vmul.f32 %v28, 0.125
    %v42 = vmul.f32 %v29, 0.125
    %v43 = vsub.f32 %v41, 1.0
    %v44 = vsub.f32 %v42, 1.0
    %45 = vst.msk [vmem:[%s1 + $0x1] sm:$0x1] %vm38, %v43
    %46 = vst.msk [vmem:[%s1 + $0x5] sm:$0x1] %vm38, %v44
    %47 = vst.msk [vmem:[%s1 + $0x2] sm:$0x1] %vm38, 1.0
    %48 = vst.msk [vmem:[%s1 + $0x6] sm:$0x1] %vm38, 1.0
    %v49 = vmul.f32 %v30, 0.125
    %v50 = vmul.f32 %v31, 0.125
    %v51 = vsub.f32 %v49, 1.0
    %v52 = vsub.f32 %v50, 1.0
    %53 = vst.msk [vmem:[%s2] sm:$0x1] %vm38, %v51
    %54 = vst.msk [vmem:[%s2 + $0x4] sm:$0x1] %vm38, %v52
    %v55 = vmul.f32 %v32, 0.125
    %v56 = vmul.f32 %v33, 0.125
    %v57 = vsub.f32 %v55, 1.0
    %v58 = vsub.f32 %v56, 1.0
    %59 = vst.msk [vmem:[%s2 + $0x1] sm:$0x1] %vm38, %v57
    %60 = vst.msk [vmem:[%s2 + $0x5] sm:$0x1] %vm38, %v58
    %61 = vst.msk [vmem:[%s2 + $0x2] sm:$0x1] %vm38, 1.0
    %62 = vst.msk [vmem:[%s2 + $0x6] sm:$0x1] %vm38, 1.0
    // Predicated region
    $region10: #{tpu_custom_call.1} parent=1 // pred_check
      _
    $region11: #{tpu_custom_call.1} parent=1 // pred_check_branch
      %64 = sbr.rel (0) target = $region13
    $region12: #{tpu_custom_call.1} parent=1 // pred_region
      _
    $region13: #{tpu_custom_call.1} parent=1 // pred_fallthru
      _
    // Predicated region
    $region14: #{tpu_custom_call.1} parent=1 // pred_check
      _
    $region15: #{tpu_custom_call.1} parent=1 // pred_check_branch
      %66 = sbr.rel (0) target = $region17
    $region16: #{tpu_custom_call.1} parent=1 // pred_region
      _
    $region17: #{tpu_custom_call.1} parent=1 // pred_fallthru
      _
    // Predicated region
    $region18: #{tpu_custom_call.1} parent=1 // pred_check
      _
    $region19: #{tpu_custom_call.1} parent=1 // pred_check_branch
      %68 = sbr.rel (0) target = $region21
    $region20: #{tpu_custom_call.1} parent=1 // pred_region
      _
    $region21: #{tpu_custom_call.1} parent=1 // pred_fallthru
      _
    // Predicated region
    $region22: #{tpu_custom_call.1} parent=1 // pred_check
      _
    $region23: #{tpu_custom_call.1} parent=1 // pred_check_branch
      %70 = sbr.rel (0) target = $region25
    $region24: #{tpu_custom_call.1} parent=1 // pred_region
      _
    $region25: #{tpu_custom_call.1} parent=1 // pred_fallthru
      _
    %71 = vsyncpa [#allocation3], 1

</llo_original>
